<compile_context>
chip_gen: v7x
topology: tpu7x:2x2x1
jax: 0.10.0
libtpu: 0.0.40
codegen_flags: <defaults>
</compile_context>

<pallas_src>
import functools

import jax
import jax.numpy as jnp
from jax import lax
from jax.experimental import pallas as pl
from jax.experimental.pallas import tpu as pltpu


def _round_up(v: int, m: int) -> int:
    return ((v + m - 1) // m) * m


def _vmem_capacity_bytes() -> int:
    try:
        return int(pltpu.get_tpu_info().vmem_capacity_bytes)
    except Exception:
        return 64 * 1024 * 1024  # conservative: assume v7x-sized VMEM


def _pick_tiling(n: int, c: int, itemsize: int, tile_n):
    vmem_cap = _vmem_capacity_bytes()
    big_vmem = vmem_cap >= 128 * 1024 * 1024          # v5e / v6e
    vmem_limit = (64 if big_vmem else 32) * 1024 * 1024
    if tile_n is None:
        # double-buffered logits+targets blocks plus ~6 (C, T) f32 temporaries
        per_sample = 2 * (c * itemsize + 4) + 6 * c * 4
        cap = max(128, ((vmem_limit // 2) // per_sample) // 128 * 128)
        default = 65536 if itemsize <= 2 else 32768   # bigger blocks for bf16
        tile_n = min(default, cap)
    tile_n = max(128, _round_up(int(tile_n), 128))
    tile_n = min(tile_n, _round_up(n, 128))
    return tile_n, vmem_limit


def _focal_loss_kernel(n_ref, alpha_ref, x_ref, t_ref, out_ref, *,
                       gamma: float, two_value_alpha: bool):
    # n_ref:     (1,)   int32 SMEM   -- global number of valid samples
    # alpha_ref: (2,)   f32 SMEM     (two-value path)  OR  (C, 1) f32 VMEM
    # x_ref:     (C, T) logits block, native dtype (samples on lanes)
    # t_ref:     (1, T) int32 targets block
    # out_ref:   (1, 128) f32 per-block partial sum
    x = x_ref[...].astype(jnp.float32)                          # (C, T)
    tgt = t_ref[...]                                            # (1, T)
    c, tw = x.shape

    # --- log-softmax over the class (sublane) axis; samples stay lane-dense
    m = jnp.max(x, axis=0, keepdims=True)                       # (1, T)
    denom = jnp.sum(jnp.exp(x - m), axis=0, keepdims=True)      # (1, T)

    # --- one-hot select of the true-class logit (no dynamic gather)
    class_ids = lax.broadcasted_iota(jnp.int32, (c, tw), 0)     # (C, T)
    onehot = class_ids == tgt                                   # (C, T)
    x_t = jnp.sum(jnp.where(onehot, x, 0.0), axis=0, keepdims=True)      # (1, T)

    if two_value_alpha:
        # alpha vector is (a0, a1, a1, ..., a1): two-scalar select on (1, T)
        a_t = jnp.where(tgt == 0, alpha_ref[0], alpha_ref[1])             # (1, T)
    else:
        alpha = alpha_ref[...].astype(jnp.float32)                        # (C, 1)
        a_t = jnp.sum(jnp.where(onehot, alpha, 0.0), axis=0, keepdims=True)

    # exact log-softmax gather: no N*C divide, no log(0) -> NaN
    log_p_t = (x_t - m) - jnp.log(denom)                        # (1, T)
    p_t = jnp.exp(log_p_t)
    one_minus = jnp.maximum(1.0 - p_t, 0.0)

    # --- focal modulation: specialize integer gamma (gamma=2 -> one vmul)
    g = float(gamma)
    if g == 0.0:
        mod = jnp.ones_like(one_minus)
    elif g.is_integer() and 1.0 <= g <= 8.0:
        mod = one_minus
        for _ in range(int(g) - 1):
            mod = mod * one_minus
    else:
        mod = jnp.power(one_minus, jnp.float32(g))

    loss = -a_t * mod * log_p_t                                 # (1, T)

    i = pl.program_id(0)
    last = pl.num_programs(0) - 1

    @pl.when(i != last)
    def _():
        # full block: every column is valid, no mask work
        out_ref[...] = jnp.full((1, 128), jnp.sum(loss), dtype=jnp.float32)

    @pl.when(i == last)
    def _():
        # ragged final block: out-of-range columns hold garbage logits; use a
        # select so NaN/Inf there cannot reach the partial sum
        col = i * tw + lax.broadcasted_iota(jnp.int32, (1, tw), 1)
        masked = jnp.where(col < n_ref[0], loss, 0.0)
        out_ref[...] = jnp.full((1, 128), jnp.sum(masked), dtype=jnp.float32)


def _focal_loss_class_major(x_cn, t_row, alpha, *, gamma, size_average, tile_n):
    c, n = x_cn.shape
    itemsize = jnp.dtype(x_cn.dtype).itemsize
    tile_n, vmem_limit = _pick_tiling(n, c, itemsize, tile_n)
    num_blocks = pl.cdiv(n, tile_n)

    n_smem = jnp.array([n], dtype=jnp.int32)

    two_value = isinstance(alpha, (int, float)) and not isinstance(alpha, bool)
    if two_value:
        assert alpha < 1
        alpha_arg = jnp.array([alpha, 1.0 - alpha], dtype=jnp.float32)
        alpha_spec = pl.BlockSpec(memory_space=pltpu.MemorySpace.SMEM)
    else:
        alpha_vec = jnp.asarray(alpha, dtype=jnp.float32).reshape(-1)
        assert alpha_vec.shape[0] == c
        alpha_arg = alpha_vec.reshape(c, 1)
        alpha_spec = pl.BlockSpec((c, 1), lambda i: (0, 0))     # resident

    kernel = functools.partial(_focal_loss_kernel, gamma=float(gamma),
                               two_value_alpha=two_value)

    cost = pl.CostEstimate(
        flops=10 * n * c + 16 * n,
        transcendentals=n * c + 2 * n,
        bytes_accessed=n * c * itemsize + n * 4 + num_blocks * 128 * 4,
    )

    partials = pl.pallas_call(
        kernel,
        grid=(num_blocks,),
        in_specs=[
            pl.BlockSpec(memory_space=pltpu.MemorySpace.SMEM),   # n_valid
            alpha_spec,                                          # alpha
            pl.BlockSpec((c, tile_n), lambda i: (0, i)),         # logits (C, T)
            pl.BlockSpec((1, tile_n), lambda i: (0, i)),         # targets (1, T)
        ],
        out_specs=pl.BlockSpec((1, 128), lambda i: (i, 0)),
        out_shape=jax.ShapeDtypeStruct((num_blocks, 128), jnp.float32),
        compiler_params=pltpu.CompilerParams(
            dimension_semantics=("parallel",),                   # megacore (v7x)
            vmem_limit_bytes=vmem_limit,
        ),
        cost_estimate=cost,
    )(n_smem, alpha_arg, x_cn, t_row)

    total = jnp.sum(partials[:, 0])
    if size_average:
        total = total / jnp.float32(n)                           # global N
    return total


def focal_loss(logits, targets, alpha=0.25, *, gamma=2.0, size_average=True,
               tile_n=None):
    """Torch-equivalent interface: logits (..., C), targets (...).

    `alpha` may be a Python float (torch's scalar-alpha construction, fast
    two-value SMEM path) or a length-C list/array (general per-class path).
    """
    c = logits.shape[-1]
    x = logits.reshape(-1, c)                  # keep native dtype on the wire
    # NOTE: this class-major relayout is one extra HBM read+write done by XLA;
    # producers that can emit (C, N) directly should call
    # focal_loss_class_major() instead and skip it.
    x_cn = x.T
    t_row = targets.reshape(1, -1).astype(jnp.int32)
    return _focal_loss_class_major(x_cn, t_row, alpha, gamma=gamma,
                                   size_average=size_average, tile_n=tile_n)


def focal_loss_class_major(logits_cn, targets, alpha=0.25, *, gamma=2.0,
                           size_average=True, tile_n=None):
    """Same loss, logits already laid out as (C, N): no wrapper transpose."""
    t_row = targets.reshape(1, -1).astype(jnp.int32)
    return _focal_loss_class_major(logits_cn, t_row, alpha, gamma=gamma,
                                   size_average=size_average, tile_n=tile_n)


def make_alpha(num_classes: int, alpha: float = 0.25) -> jnp.ndarray:
    # Matches the PyTorch __init__: alpha[0] = alpha, alpha[1:] = 1 - alpha
    a = jnp.full((num_classes,), 1.0 - alpha, dtype=jnp.float32)
    return a.at[0].set(alpha)


def focal_loss_ref(logits, targets, alpha_vec, *, gamma=2.0, size_average=True):
    c = logits.shape[-1]
    x = logits.reshape(-1, c).astype(jnp.float32)
    t = targets.reshape(-1).astype(jnp.int32)
    p = jax.nn.softmax(x, axis=-1)
    p_t = jnp.take_along_axis(p, t[:, None], axis=1)[:, 0]
    a_t = alpha_vec[t]
    loss = -a_t * jnp.power(1.0 - p_t, gamma) * jnp.log(p_t)
    return jnp.mean(loss) if size_average else jnp.sum(loss)


if __name__ == "__main__":
    num_classes = 16
    gamma = 2.0
    alpha = 0.25
    alpha_vec = make_alpha(num_classes, alpha)

    key = jax.random.PRNGKey(0)
    k1, k2, k3, k4, k5, k6 = jax.random.split(key, 6)

    # test 1: small f32 input, N=16 (single ragged block), mean, scalar alpha
    batch, seq = 2, 8
    logits = jax.random.normal(k1, (batch, seq, num_classes), dtype=jnp.float32)
    targets = jax.random.randint(k2, (batch, seq), 0, num_classes, dtype=jnp.int32)
    out = jax.block_until_ready(
        focal_loss(logits, targets, alpha, gamma=gamma, size_average=True))
    ref = focal_loss_ref(logits, targets, alpha_vec, gamma=gamma, size_average=True)
    assert jnp.allclose(out, ref, rtol=1e-3, atol=1e-5), (out, ref)

    # test 2: bf16 logits, 3 grid blocks with a ragged final block, sum
    n2 = 600
    logits2 = jax.random.normal(k3, (n2, num_classes), dtype=jnp.bfloat16)
    targets2 = jax.random.randint(k4, (n2,), 0, num_classes, dtype=jnp.int32)
    out2 = jax.block_until_ready(
        focal_loss(logits2, targets2, alpha, gamma=gamma, size_average=False,
                   tile_n=256))
    ref2 = focal_loss_ref(logits2, targets2, alpha_vec, gamma=gamma,
                          size_average=False)
    assert jnp.allclose(out2, ref2, rtol=1e-2, atol=1e-4), (out2, ref2)

    # test 3: list alpha (general per-class VMEM path), f32, mean
    n3 = 40
    alpha_list = [(i + 1) / 20.0 for i in range(num_classes)]
    logits3 = jax.random.normal(k5, (n3, num_classes), dtype=jnp.float32)
    targets3 = jax.random.randint(k6, (n3,), 0, num_classes, dtype=jnp.int32)
    out3 = jax.block_until_ready(
        focal_loss(logits3, targets3, alpha_list, gamma=gamma, size_average=True))
    ref3 = focal_loss_ref(logits3, targets3, jnp.array(alpha_list, jnp.float32),
                          gamma=gamma, size_average=True)
    assert jnp.allclose(out3, ref3, rtol=1e-3, atol=1e-5), (out3, ref3)

    print("KERNEL_OK")
</pallas_src>

<mosaic_0001>
module attributes {stable_mosaic.version = 11 : i64} {
  func.func @_focal_loss_kernel(%arg0: i32, %arg1: memref<1xi32, #tpu.memory_space<smem>>, %arg2: memref<2xf32, #tpu.memory_space<smem>>, %arg3: memref<16x128xf32, #tpu.memory_space<vmem>>, %arg4: memref<1x128xi32, #tpu.memory_space<vmem>>, %arg5: memref<1x128xf32, #tpu.memory_space<vmem>>) attributes {dimension_semantics = [#tpu.dimension_semantics<parallel>], iteration_bounds = array<i64: 1>, scalar_prefetch = 0 : i64, scratch_operands = 0 : i64, tpu.core_type = #tpu.core_type<tc>, window_params = [{transform_indices = @transform_0, window_bounds = array<i64: 1>}, {transform_indices = @transform_1, window_bounds = array<i64: 2>}, {transform_indices = @transform_2, window_bounds = array<i64: 16, 128>}, {transform_indices = @transform_3, window_bounds = array<i64: 1, 128>}, {transform_indices = @transform_4, window_bounds = array<i64: 1, 128>}]} {
    %c0 = arith.constant 0 : index
    %c0_0 = arith.constant 0 : index
    %0 = vector.load %arg3[%c0, %c0_0] : memref<16x128xf32, #tpu.memory_space<vmem>>, vector<16x128xf32>
    %c0_1 = arith.constant 0 : index
    %c0_2 = arith.constant 0 : index
    %1 = vector.load %arg4[%c0_1, %c0_2] : memref<1x128xi32, #tpu.memory_space<vmem>>, vector<1x128xi32>
    %cst = arith.constant dense<0xFF800000> : vector<128xf32>
    %2 = vector.multi_reduction <maximumf>, %0, %cst [0] : vector<16x128xf32> to vector<128xf32>
    %3 = vector.shape_cast %2 : vector<128xf32> to vector<1x128xf32>
    %4 = vector.broadcast %3 : vector<1x128xf32> to vector<16x128xf32>
    %5 = arith.subf %0, %4 : vector<16x128xf32>
    %6 = math.exp %5 : vector<16x128xf32>
    %cst_3 = arith.constant dense<0.000000e+00> : vector<128xf32>
    %7 = vector.multi_reduction <add>, %6, %cst_3 [0] : vector<16x128xf32> to vector<128xf32>
    %8 = vector.shape_cast %7 : vector<128xf32> to vector<1x128xf32>
    %9 = tpu.iota {dimensions = array<i32: 0>} : vector<16x128xi32>
    %10 = vector.broadcast %1 : vector<1x128xi32> to vector<16x128xi32>
    %11 = arith.cmpi eq, %9, %10 : vector<16x128xi32>
    %cst_4 = arith.constant 0.000000e+00 : f32
    %12 = vector.broadcast %cst_4 : f32 to vector<16x128xf32>
    %13 = arith.select %11, %0, %12 : vector<16x128xi1>, vector<16x128xf32>
    %cst_5 = arith.constant dense<0.000000e+00> : vector<128xf32>
    %14 = vector.multi_reduction <add>, %13, %cst_5 [0] : vector<16x128xf32> to vector<128xf32>
    %15 = vector.shape_cast %14 : vector<128xf32> to vector<1x128xf32>
    %c0_i32 = arith.constant 0 : i32
    %16 = vector.broadcast %c0_i32 : i32 to vector<1x128xi32>
    %17 = arith.cmpi eq, %1, %16 : vector<1x128xi32>
    %c0_6 = arith.constant 0 : index
    %18 = memref.load %arg2[%c0_6] : memref<2xf32, #tpu.memory_space<smem>>
    %c1 = arith.constant 1 : index
    %19 = memref.load %arg2[%c1] : memref<2xf32, #tpu.memory_space<smem>>
    %20 = vector.broadcast %18 : f32 to vector<1x128xf32>
    %21 = vector.broadcast %19 : f32 to vector<1x128xf32>
    %22 = arith.select %17, %20, %21 : vector<1x128xi1>, vector<1x128xf32>
    %23 = arith.subf %15, %3 : vector<1x128xf32>
    %24 = math.log %8 : vector<1x128xf32>
    %25 = arith.subf %23, %24 : vector<1x128xf32>
    %26 = math.exp %25 : vector<1x128xf32>
    %cst_7 = arith.constant 1.000000e+00 : f32
    %27 = vector.broadcast %cst_7 : f32 to vector<1x128xf32>
    %28 = arith.subf %27, %26 : vector<1x128xf32>
    %cst_8 = arith.constant 0.000000e+00 : f32
    %29 = vector.broadcast %cst_8 : f32 to vector<1x128xf32>
    %30 = arith.maximumf %28, %29 : vector<1x128xf32>
    %31 = arith.mulf %30, %30 : vector<1x128xf32>
    %cst_9 = arith.constant 0.000000e+00 : f32
    %32 = vector.broadcast %cst_9 : f32 to vector<1x128xf32>
    %33 = arith.subf %32, %22 : vector<1x128xf32>
    %34 = arith.mulf %33, %31 : vector<1x128xf32>
    %35 = arith.mulf %34, %25 : vector<1x128xf32>
    %c0_i32_10 = arith.constant 0 : i32
    %36 = arith.cmpi ne, %arg0, %c0_i32_10 : i32
    %37 = arith.extui %36 : i1 to i32
    %c0_i32_11 = arith.constant 0 : i32
    %38 = arith.cmpi ne, %37, %c0_i32_11 : i32
    scf.if %38 {
      %42 = vector.shape_cast %35 : vector<1x128xf32> to vector<1x1x128xf32>
      %cst_14 = arith.constant dense<0.000000e+00> : vector<1xf32>
      %43 = vector.multi_reduction <add>, %42, %cst_14 [1, 2] : vector<1x1x128xf32> to vector<1xf32>
      %44 = vector.shape_cast %43 : vector<1xf32> to vector<1x1x1xf32>
      %45 = vector.extract %44[0, 0, 0] : f32 from vector<1x1x1xf32>
      %46 = vector.broadcast %45 : f32 to vector<1x128xf32>
      %c0_15 = arith.constant 0 : index
      %c0_16 = arith.constant 0 : index
      %47 = vector.load %arg5[%c0_15, %c0_16] : memref<1x128xf32, #tpu.memory_space<vmem>>, vector<1x128xf32>
      tpu.vector_store %arg5[%c0_15, %c0_16], %46 {strides = array<i32>} : memref<1x128xf32, #tpu.memory_space<vmem>>, vector<1x128xf32>,
    } else {
    }
    %c0_i32_12 = arith.constant 0 : i32
    %39 = arith.cmpi eq, %arg0, %c0_i32_12 : i32
    %40 = arith.extui %39 : i1 to i32
    %c0_i32_13 = arith.constant 0 : i32
    %41 = arith.cmpi ne, %40, %c0_i32_13 : i32
    scf.if %41 {
      %c128_i32 = arith.constant 128 : i32
      %42 = arith.muli %arg0, %c128_i32 : i32
      %43 = tpu.iota {dimensions = array<i32: 1>} : vector<1x128xi32>
      %44 = vector.broadcast %42 : i32 to vector<1x128xi32>
      %45 = arith.addi %44, %43 : vector<1x128xi32>
      %c0_14 = arith.constant 0 : index
      %46 = memref.load %arg1[%c0_14] : memref<1xi32, #tpu.memory_space<smem>>
      %47 = vector.broadcast %46 : i32 to vector<1x128xi32>
      %48 = arith.cmpi slt, %45, %47 : vector<1x128xi32>
      %cst_15 = arith.constant 0.000000e+00 : f32
      %49 = vector.broadcast %cst_15 : f32 to vector<1x128xf32>
      %50 = arith.select %48, %35, %49 : vector<1x128xi1>, vector<1x128xf32>
      %51 = vector.shape_cast %50 : vector<1x128xf32> to vector<1x1x128xf32>
      %cst_16 = arith.constant dense<0.000000e+00> : vector<1xf32>
      %52 = vector.multi_reduction <add>, %51, %cst_16 [1, 2] : vector<1x1x128xf32> to vector<1xf32>
      %53 = vector.shape_cast %52 : vector<1xf32> to vector<1x1x1xf32>
      %54 = vector.extract %53[0, 0, 0] : f32 from vector<1x1x1xf32>
      %55 = vector.broadcast %54 : f32 to vector<1x128xf32>
      %c0_17 = arith.constant 0 : index
      %c0_18 = arith.constant 0 : index
      %56 = vector.load %arg5[%c0_17, %c0_18] : memref<1x128xf32, #tpu.memory_space<vmem>>, vector<1x128xf32>
      tpu.vector_store %arg5[%c0_17, %c0_18], %55 {strides = array<i32>} : memref<1x128xf32, #tpu.memory_space<vmem>>, vector<1x128xf32>,
    } else {
    }
    return
  }
  func.func @transform_0(%arg0: i32) -> i32 {
    %c0_i32 = arith.constant 0 : i32
    %c0_i32_0 = arith.constant 0 : i32
    return %c0_i32 : i32
  }
  func.func @transform_1(%arg0: i32) -> i32 {
    %c0_i32 = arith.constant 0 : i32
    %c0_i32_0 = arith.constant 0 : i32
    return %c0_i32 : i32
  }
  func.func @transform_2(%arg0: i32) -> (i32, i32) {
    %c0_i32 = arith.constant 0 : i32
    %c0_i32_0 = arith.constant 0 : i32
    return %c0_i32, %arg0 : i32, i32
  }
  func.func @transform_3(%arg0: i32) -> (i32, i32) {
    %c0_i32 = arith.constant 0 : i32
    %c0_i32_0 = arith.constant 0 : i32
    return %c0_i32, %arg0 : i32, i32
  }
  func.func @transform_4(%arg0: i32) -> (i32, i32) {
    %c0_i32 = arith.constant 0 : i32
    %c0_i32_0 = arith.constant 0 : i32
    return %arg0, %c0_i32 : i32, i32
  }
}

</mosaic_0001>

<llo_original>
// kernel: tpu_custom_call.1
$region0: #{tpu_custom_call.1}
  #allocation0 [shape = 'u32[]', space=smem, size = 0x4, offset = 0x4, fixed_abs, tag = 'smem constant byte address 0x4 - core index']
  #allocation1 [shape = 'u32[144,128]{1,0:T(1,128)}', space=vmem, size = 0x12000, scoped, tag = 'internal scratch']
  #allocation2 [shape = 's32[1]{0:T(128)S(6)}', space=smem, size = 0x200, scoped, tag = 'scoped memory for tpu_custom_call.1']
  %s0 = inlined_call_operand.<no memory space> [shape: s32[1], index: 0, kind: input, shape index: {}]
  %s1 = inlined_call_operand.vmem [shape: f32[2], index: 1, kind: input, shape index: {}]
  %s2 = inlined_call_operand.hbm [shape: f32[16,16], index: 2, kind: input, shape index: {}]
  %s3 = inlined_call_operand.vmem [shape: s32[1,16], index: 3, kind: input, shape index: {}]
  %s4 = inlined_call_operand.hbm [shape: f32[1,128], index: 4, kind: output, shape index: {}]
  %s5 = sld [smem:[#allocation0]]
  $region42: #{tpu_custom_call.1} parent=0
    _
  %s7 = ssub.s32 1, %s5
  %s8 = scalar_select 0, %s7, %s5
  %9 = sst [smem:[#allocation2]] %s0
  $region1: #{tpu_custom_call.1} parent=0
    #allocation3 [shape = 'u8[512]{0}', space=smem, size = 0x200, scoped, tag = 'input window, operand 1, single buffered']
    #allocation4 [shape = 's32[1]{0}', space=sflag, size = 0x4, scoped, tag = 'scoped memory for tpu_custom_call.1']
    #allocation5 [shape = 's32[1]{0}', space=sflag, size = 0x4, scoped, tag = 'scoped memory for tpu_custom_call.1']
    #allocation6 [shape = 's32[1]{0}', space=sflag, size = 0x4, scoped, tag = 'scoped memory for tpu_custom_call.1']
    #allocation7 [shape = 'u8[8192]{0}', space=vmem, size = 0x2000, scoped, tag = 'input window, operand 2, single buffered']
    #allocation8 [shape = 'u8[512]{0}', space=vmem, size = 0x400, scoped, tag = 'output window, operand 0, single buffered']
    %10 = vsyncpa [#allocation6], 0
    %11 = vsyncpa [#allocation4], 0
    %12 = vsyncpa [#allocation5], 0
    // Predicated region
    $region2: #{tpu_custom_call.1} parent=1 // pred_check
      _
    $region3: #{tpu_custom_call.1} parent=1 // pred_check_branch
      %14 = sbr.rel (0) target = $region5
    $region4: #{tpu_custom_call.1} parent=1 // pred_region
      _
    $region5: #{tpu_custom_call.1} parent=1 // pred_fallthru
      _
    // Predicated region
    $region6: #{tpu_custom_call.1} parent=1 // pred_check
      _
    $region7: #{tpu_custom_call.1} parent=1 // pred_check_branch
      %16 = sbr.rel (0) target = $region9
    $region8: #{tpu_custom_call.1} parent=1 // pred_region
      %s18 = ssub.s32 16, 16
      %19 = vsyncadd [#allocation6], %s18
      %s21 = sshll.u32 %s1, 4
      %s22 = int_to_ptr.vmem [resolvable:$true] %s21
      %24 = dma.vmem_to_smem %s22, 16, [#allocation3], [#allocation6]
    $region9: #{tpu_custom_call.1} parent=1 // pred_fallthru
      _
    // Predicated region
    $region10: #{tpu_custom_call.1} parent=1 // pred_check
      _
    $region11: #{tpu_custom_call.1} parent=1 // pred_check_branch
      %26 = sbr.rel (0) target = $region13
    $region12: #{tpu_custom_call.1} parent=1 // pred_region
      %s28 = ssub.s32 256, 256
      %29 = vsyncadd [#allocation4], %s28
      %s30 = sshll.u32 [#allocation7], 4
      %s31 = int_to_ptr.vmem [resolvable:$true] %s30
      %36 = dma.hbm_to_vmem [thread:$0]  %s2, 256, %s31, [#allocation4], 128, 128, 8
    $region13: #{tpu_custom_call.1} parent=1 // pred_fallthru
      _
    // Predicated region
    $region14: #{tpu_custom_call.1} parent=1 // pred_check
      _
    $region15: #{tpu_custom_call.1} parent=1 // pred_check_branch
      %38 = sbr.rel (0) target = $region17
    $region16: #{tpu_custom_call.1} parent=1 // pred_region
      _
    $region17: #{tpu_custom_call.1} parent=1 // pred_fallthru
      _
    // Predicated region
    $region18: #{tpu_custom_call.1} parent=1 // pred_check
      _
    $region19: #{tpu_custom_call.1} parent=1 // pred_check_branch
      %40 = sbr.rel (0) target = $region21
    $region20: #{tpu_custom_call.1} parent=1 // pred_region
      %41 = dma.done [#allocation6], 16
    $region21: #{tpu_custom_call.1} parent=1 // pred_fallthru
      _
    // Predicated region
    $region22: #{tpu_custom_call.1} parent=1 // pred_check
      _
    $region23: #{tpu_custom_call.1} parent=1 // pred_check_branch
      %43 = sbr.rel (0) target = $region25
    $region24: #{tpu_custom_call.1} parent=1 // pred_region
      %44 = dma.done [#allocation4], 256
    $region25: #{tpu_custom_call.1} parent=1 // pred_fallthru
      _
    %45 = sfence
    %v46 = vld [vmem:[#allocation7] sm:$0xff]
    %v47 = vld [vmem:[#allocation7 + $0x8] sm:$0xff]
    %v48 = vld [vmem:[%s3] sm:$0x1]
    %v49 = vmax.f32 %v46, %v47
    %v50 = vrot.slane %v49, 4
    %v51 = vmax.f32 %v49, %v50
    %v52 = vrot.slane %v51, 2
    %v53 = vmax.f32 %v51, %v52
    %v54 = vrot.slane %v53, 1
    %v55 = vmax.f32 %v53, %v54
    %v56 = vsub.f32 %v46, %v55
    %v57 = vsub.f32 %v47, %v55
    %v58 = vmul.f32 %v56, 1.442695
    %v59 = vpow.pop %v58
    %v60 = vmul.f32 %v57, 1.442695
    %v61 = vpow.pop %v60
    %v62 = vadd.f32 %v59, %v61
    %v63 = vrot.slane %v62, 4
    %v64 = vadd.f32 %v62, %v63
    %v65 = vrot.slane %v64, 2
    %v66 = vadd.f32 %v64, %v65
    %v67 = vrot.slane %v66, 1
    %v68 = vadd.f32 %v66, %v67
    %v69 = vlaneseq
    %v70 = vshrl.u32 %v69, 7
    %v71 = vadd.s32 %v70, 8
    %v72 = vlaneseq
    %v73 = vshrl.u32 %v72, 7
    %v74 = vsub.s32 0, %v73
    %v75 = vrot.slane %v48, %v74
    %vm76 = vcmp.eq.s32.totalorder %v70, %v75
    %vm77 = vcmp.eq.s32.totalorder %v71, %v75
    %v78 = vsel %vm76, %v46, 0.0
    %v79 = vsel %vm77, %v47, 0.0
    %v80 = vadd.f32 %v78, %v79
    %v81 = vrot.slane %v80, 4
    %v82 = vadd.f32 %v80, %v81
    %v83 = vrot.slane %v82, 2
    %v84 = vadd.f32 %v82, %v83
    %v85 = vrot.slane %v84, 1
    %v86 = vadd.f32 %v84, %v85
    %vm87 = vcmp.eq.s32.totalorder %v48, 0
    %s88 = sld [smem:[#allocation3]]
    %s89 = sld [smem:[#allocation3 + $0x1]]
    %v90 = vstv %s88
    %v91 = vstv %s89
    %v92 = vsel %vm87, %v90, %v91
    %v93 = vsub.f32 %v86, %v55
    %v94 = vlog2.pop %v68
    %v95 = vmul.f32 %v94, 0.6931472
    %v96 = vsub.f32 %v93, %v95
    %v97 = vmul.f32 %v96, 1.442695
    %v98 = vpow.pop %v97
    %v99 = vsub.f32 1.0, %v98
    %v100 = vmax.f32 %v99, 0.0
    %v101 = vmul.f32 %v100, %v100
    %v102 = vsub.f32 0.0, %v92
    %v103 = vmul.f32 %v102, %v101
    %v104 = vmul.f32 %v103, %v96
    %p105 = scmp.ne.s32.totalorder 0, 0
    // Predicated region
    $region26: #{tpu_custom_call.1} parent=1 // pred_check
      %p106 = pneg %p105
    $region27: #{tpu_custom_call.1} parent=1 // pred_check_branch
      %108 = sbr.rel (%p106) target = $region29
    $region28: #{tpu_custom_call.1} parent=1 // pred_region
      %vm109 = vcmask 1040384
      %v110 = vsel %vm109, %v104, 0.0
      %111 = vadd.xlane.f32.xlu0 %v110
      %v112 = vpop.xlane.xlu0 %111
      %v113 = vrot.slane %v112, 4
      %v114 = vadd.f32 %v112, %v113
      %v115 = vrot.slane %v114, 2
      %v116 = vadd.f32 %v114, %v115
      %v117 = vrot.slane %v116, 1
      %v118 = vadd.f32 %v116, %v117
      %s119 = vtos %v118
      %v120 = vstv %s119
      %121 = vst [vmem:[#allocation8] sm:$0x1] %v120
    $region29: #{tpu_custom_call.1} parent=1 // pred_fallthru
      _
    %p122 = scmp.eq.s32.totalorder 0, 0
    // Predicated region
    $region30: #{tpu_custom_call.1} parent=1 // pred_check
      %p123 = pneg %p122
    $region31: #{tpu_custom_call.1} parent=1 // pred_check_branch
      %125 = sbr.rel (%p123) target = $region33
    $region32: #{tpu_custom_call.1} parent=1 // pred_region
      %s126 = smul.u32 0, 128
      %v127 = vlaneseq
      %v128 = vand.u32 %v127, 127
      %v129 = vstv %s126
      %v130 = vadd.s32 %v129, %v128
      %s131 = sld [smem:[#allocation2]]
      %v132 = vstv %s131
      %vm133 = vcmp.lt.s32.totalorder %v130, %v132
      %v134 = vsel %vm133, %v104, 0.0
      %vm135 = vcmask 1040384
      %v136 = vsel %vm135, %v134, 0.0
      %137 = vadd.xlane.f32.xlu0 %v136
      %v138 = vpop.xlane.xlu0 %137
      %v139 = vrot.slane %v138, 4
      %v140 = vadd.f32 %v138, %v139
      %v141 = vrot.slane %v140, 2
      %v142 = vadd.f32 %v140, %v141
      %v143 = vrot.slane %v142, 1
      %v144 = vadd.f32 %v142, %v143
      %s145 = vtos %v144
      %v146 = vstv %s145
      %147 = vst [vmem:[#allocation8] sm:$0x1] %v146
    $region33: #{tpu_custom_call.1} parent=1 // pred_fallthru
      _
    // Predicated region
    $region34: #{tpu_custom_call.1} parent=1 // pred_check
      _
    $region35: #{tpu_custom_call.1} parent=1 // pred_check_branch
      %149 = sbr.rel (0) target = $region37
    $region36: #{tpu_custom_call.1} parent=1 // pred_region
      %s151 = ssub.s32 16, 16
      %152 = vsyncadd [#allocation5], %s151
      %s154 = sshll.u32 [#allocation8], 4
      %s155 = int_to_ptr.vmem [resolvable:$true] %s154
      %157 = dma.vmem_to_hbm [thread:$0]  %s155, 16, %s4, [#allocation5]
    $region37: #{tpu_custom_call.1} parent=1 // pred_fallthru
      _
    // Predicated region
    $region38: #{tpu_custom_call.1} parent=1 // pred_check
      _
    $region39: #{tpu_custom_call.1} parent=1 // pred_check_branch
      %159 = sbr.rel (0) target = $region41
    $region40: #{tpu_custom_call.1} parent=1 // pred_region
      %160 = dma.done [#allocation5], 16
    $region41: #{tpu_custom_call.1} parent=1 // pred_fallthru
      _
    %161 = vsyncpa [#allocation4], 1
    %162 = vsyncpa [#allocation5], 1
    %163 = vsyncpa [#allocation6], 1

</llo_original>
